<compile_context>
chip_gen: v6e
topology: v6e:2x2x1
jax: 0.10.0
libtpu: 0.0.40
codegen_flags: <defaults>
</compile_context>

<pallas_src>
import jax
import jax.numpy as jnp
from jax.experimental import pallas as pl
from jax.experimental.pallas import tpu as pltpu

N_STATES = 21
N_ACTIONS = 1

_VMEM_LIMIT_BYTES = 48 * 1024 * 1024  # <= v7x 64 MiB physical; > v5e/v6e defaults


def _round_up(x, m):
    return ((x + m - 1) // m) * m


def speed_kernel(x_ref, w1t_ref, b1_ref, w2_ref, b2_ref, o_ref):
    x = x_ref[...].astype(jnp.float32)                      # (tile_b, 21)
    # Layer 1, transposed: h[j, b] = sum_k w1[k, j] * x[b, k]  -> (H, tile_b).
    # NT dot_general (contract the feature dim of both operands) puts the batch
    # in the lane dimension; everything downstream stays lane-dense.
    h = jax.lax.dot_general(
        w1t_ref[...], x,
        dimension_numbers=(((1,), (1,)), ((), ())),
        preferred_element_type=jnp.float32)
    h = h + b1_ref[...]                                     # (H, 1) lane-broadcast
    # Sigmoid via the tanh identity: single EUP op, keeps the VALU free.
    h = 0.5 * jnp.tanh(0.5 * h) + 0.5
    # Layer 2 (H -> 1): VPU multiply + cross-sublane reduce -> (1, tile_b).
    out = jnp.sum(h * w2_ref[...], axis=0, keepdims=True)
    o_ref[...] = (out + b2_ref[0, 0]).astype(o_ref.dtype)   # dense lane store


def speed_forward(x, w1, b1, w2, b2, *, tile_b=32768):
    """x: (B, 21) -> (B, 1) float32.

    w1: (21, H), b1: (1, H), w2: (H, 1), b2: (1, 1)  (x @ W + b convention,
    equivalent to PyTorch's weight of shape (out_features, in_features)).
    """
    B = x.shape[0]
    H = w1.shape[1]

    # One-time, tiny re-layouts of the resident parameters (negligible HBM).
    w1t = jnp.asarray(w1, jnp.float32).T                    # (H, 21)
    b1c = jnp.asarray(b1, jnp.float32).reshape(H, 1)        # (H, 1)
    w2c = jnp.asarray(w2, jnp.float32).reshape(H, 1)        # (H, 1)
    b2s = jnp.asarray(b2, jnp.float32).reshape(1, 1)        # SMEM scalar

    # --- batch tile selection -------------------------------------------------
    # Per-row streaming VMEM (f32): x lane-padded 21->128, double-buffered,
    # plus ~3 (H, tile) temporaries (h, sigmoid, h*w2) and the lane-dense out.
    per_row_vmem = 2 * 128 * 4 + 3 * H * 4 + 2 * 4
    max_rows = max(128, int(0.70 * _VMEM_LIMIT_BYTES) // per_row_vmem)

    aligned_b = _round_up(B, 8)
    tile = max(8, min(int(tile_b), aligned_b, max_rows))
    if tile < aligned_b:
        # Multi-step grid: the (1, tile) output block needs tile % 128 == 0.
        tile = max(128, (tile // 128) * 128)
    elif B >= 4096:
        # Whole batch fits in one tile but is large: split into >=2 grid steps
        # so the "parallel" batch axis feeds both v7x TensorCores.
        tile = max(128, _round_up(pl.cdiv(aligned_b, 2), 128))

    grid_b = pl.cdiv(B, tile)
    out_cols = grid_b * tile          # padded tail (if any) sliced off below

    out2d = pl.pallas_call(
        speed_kernel,
        out_shape=jax.ShapeDtypeStruct((1, out_cols), jnp.float32),
        grid=(grid_b,),
        in_specs=[
            # x streamed in (tile, 21) row tiles; last block may be partial.
            # TODO(synk): pipeline_mode=pl.Buffered(3) if a trace shows exposed DMA.
            pl.BlockSpec((tile, N_STATES), lambda i: (i, 0)),
            pl.BlockSpec((H, N_STATES), lambda i: (0, 0)),        # W1^T resident
            pl.BlockSpec((H, 1), lambda i: (0, 0)),               # b1 resident
            pl.BlockSpec((H, 1), lambda i: (0, 0)),               # w2 resident
            pl.BlockSpec(memory_space=pltpu.MemorySpace.SMEM),    # b2 scalar
        ],
        out_specs=pl.BlockSpec((1, tile), lambda i: (0, i)),      # lane-dense
        compiler_params=pltpu.CompilerParams(
            dimension_semantics=("parallel",),
            vmem_limit_bytes=_VMEM_LIMIT_BYTES),
    )(x, w1t, b1c, w2c, b2s)

    # (1, out_cols) -> (B, 1); slicing the padded tail touches only B*4 bytes.
    return out2d[0, :B].reshape(B, 1)


def init_params(key, hidden_dimension):
    """PyTorch nn.Linear-style init, stored in the x @ W (in, out) convention."""
    k1, k2, k3, k4 = jax.random.split(key, 4)
    bound1 = 1.0 / (N_STATES ** 0.5)
    bound2 = 1.0 / (hidden_dimension ** 0.5)
    w1 = jax.random.uniform(k1, (N_STATES, hidden_dimension), jnp.float32,
                            -bound1, bound1)
    b1 = jax.random.uniform(k2, (1, hidden_dimension), jnp.float32,
                            -bound1, bound1)
    w2 = jax.random.uniform(k3, (hidden_dimension, N_ACTIONS), jnp.float32,
                            -bound2, bound2)
    b2 = jax.random.uniform(k4, (1, N_ACTIONS), jnp.float32,
                            -bound2, bound2)
    return w1, b1, w2, b2


def _reference(x, w1, b1, w2, b2):
    """Pure-JAX f32 reference."""
    return jax.nn.sigmoid(x @ w1 + b1) @ w2 + b2


if __name__ == "__main__":
    key = jax.random.PRNGKey(0)
    k_x, k_p = jax.random.split(key)

    batch = 8
    hidden_dimension = 32

    x = jax.random.normal(k_x, (batch, N_STATES), jnp.float32)
    w1, b1, w2, b2 = init_params(k_p, hidden_dimension)

    out = speed_forward(x, w1, b1, w2, b2)
    out = jax.block_until_ready(out)

    ref = _reference(x, w1, b1, w2, b2)
    assert out.shape == (batch, N_ACTIONS), out.shape
    max_err = float(jnp.max(jnp.abs(out - ref)))
    assert jnp.allclose(out, ref, atol=2e-3, rtol=2e-3), f"max abs err = {max_err}"

    print("KERNEL_OK")
</pallas_src>

<mosaic_0001>
module attributes {stable_mosaic.version = 11 : i64} {
  func.func @speed_kernel(%arg0: i32, %arg1: memref<8x21xf32, #tpu.memory_space<vmem>>, %arg2: memref<32x21xf32, #tpu.memory_space<vmem>>, %arg3: memref<32x1xf32, #tpu.memory_space<vmem>>, %arg4: memref<32x1xf32, #tpu.memory_space<vmem>>, %arg5: memref<1x1xf32, #tpu.memory_space<smem>>, %arg6: memref<1x8xf32, #tpu.memory_space<vmem>>) attributes {dimension_semantics = [#tpu.dimension_semantics<parallel>], iteration_bounds = array<i64: 1>, scalar_prefetch = 0 : i64, scratch_operands = 0 : i64, tpu.core_type = #tpu.core_type<tc>, window_params = [{transform_indices = @transform_0, window_bounds = array<i64: 8, 21>}, {pipeline_mode = #tpu.pipeline_mode<synchronous>, transform_indices = @transform_1, window_bounds = array<i64: 32, 21>}, {pipeline_mode = #tpu.pipeline_mode<synchronous>, transform_indices = @transform_2, window_bounds = array<i64: 32, 1>}, {pipeline_mode = #tpu.pipeline_mode<synchronous>, transform_indices = @transform_3, window_bounds = array<i64: 32, 1>}, {transform_indices = @transform_4, window_bounds = array<i64: 1, 1>}, {transform_indices = @transform_5, window_bounds = array<i64: 1, 8>}]} {
    %c0 = arith.constant 0 : index
    %c0_0 = arith.constant 0 : index
    %0 = vector.load %arg1[%c0, %c0_0] : memref<8x21xf32, #tpu.memory_space<vmem>>, vector<8x21xf32>
    %c0_1 = arith.constant 0 : index
    %c0_2 = arith.constant 0 : index
    %1 = vector.load %arg2[%c0_1, %c0_2] : memref<32x21xf32, #tpu.memory_space<vmem>>, vector<32x21xf32>
    %cst = arith.constant dense<0.000000e+00> : vector<32x8xf32>
    %2 = tpu.matmul %1, %0, %cst {dimension_numbers = #tpu.dot_dimension_numbers<[1], [1], [0], [0], [0, 0, 1, 0], [], []>} : vector<32x21xf32>, vector<8x21xf32>, vector<32x8xf32> -> vector<32x8xf32>
    %c0_3 = arith.constant 0 : index
    %c0_4 = arith.constant 0 : index
    %3 = vector.load %arg3[%c0_3, %c0_4] : memref<32x1xf32, #tpu.memory_space<vmem>>, vector<32x1xf32>
    %4 = vector.broadcast %3 : vector<32x1xf32> to vector<32x8xf32>
    %5 = arith.addf %2, %4 : vector<32x8xf32>
    %cst_5 = arith.constant 5.000000e-01 : f32
    %6 = vector.broadcast %cst_5 : f32 to vector<32x8xf32>
    %7 = arith.mulf %6, %5 : vector<32x8xf32>
    %8 = math.tanh %7 : vector<32x8xf32>
    %cst_6 = arith.constant 5.000000e-01 : f32
    %9 = vector.broadcast %cst_6 : f32 to vector<32x8xf32>
    %10 = arith.mulf %9, %8 : vector<32x8xf32>
    %cst_7 = arith.constant 5.000000e-01 : f32
    %11 = vector.broadcast %cst_7 : f32 to vector<32x8xf32>
    %12 = arith.addf %10, %11 : vector<32x8xf32>
    %c0_8 = arith.constant 0 : index
    %c0_9 = arith.constant 0 : index
    %13 = vector.load %arg4[%c0_8, %c0_9] : memref<32x1xf32, #tpu.memory_space<vmem>>, vector<32x1xf32>
    %14 = vector.broadcast %13 : vector<32x1xf32> to vector<32x8xf32>
    %15 = arith.mulf %12, %14 : vector<32x8xf32>
    %cst_10 = arith.constant dense<0.000000e+00> : vector<8xf32>
    %16 = vector.multi_reduction <add>, %15, %cst_10 [0] : vector<32x8xf32> to vector<8xf32>
    %17 = vector.shape_cast %16 : vector<8xf32> to vector<1x8xf32>
    %c0_11 = arith.constant 0 : index
    %c0_12 = arith.constant 0 : index
    %18 = memref.load %arg5[%c0_11, %c0_12] : memref<1x1xf32, #tpu.memory_space<smem>>
    %19 = vector.broadcast %18 : f32 to vector<1x8xf32>
    %20 = arith.addf %17, %19 : vector<1x8xf32>
    %c0_13 = arith.constant 0 : index
    %c0_14 = arith.constant 0 : index
    %21 = vector.load %arg6[%c0_13, %c0_14] : memref<1x8xf32, #tpu.memory_space<vmem>>, vector<1x8xf32>
    tpu.vector_store %arg6[%c0_13, %c0_14], %20 {strides = array<i32>} : memref<1x8xf32, #tpu.memory_space<vmem>>, vector<1x8xf32>,
    return
  }
  func.func @transform_0(%arg0: i32) -> (i32, i32) {
    %c0_i32 = arith.constant 0 : i32
    %c0_i32_0 = arith.constant 0 : i32
    return %arg0, %c0_i32 : i32, i32
  }
  func.func @transform_1(%arg0: i32) -> (i32, i32) {
    %c0_i32 = arith.constant 0 : i32
    %c0_i32_0 = arith.constant 0 : i32
    %c0_i32_1 = arith.constant 0 : i32
    return %c0_i32, %c0_i32_0 : i32, i32
  }
  func.func @transform_2(%arg0: i32) -> (i32, i32) {
    %c0_i32 = arith.constant 0 : i32
    %c0_i32_0 = arith.constant 0 : i32
    %c0_i32_1 = arith.constant 0 : i32
    return %c0_i32, %c0_i32_0 : i32, i32
  }
  func.func @transform_3(%arg0: i32) -> (i32, i32) {
    %c0_i32 = arith.constant 0 : i32
    %c0_i32_0 = arith.constant 0 : i32
    %c0_i32_1 = arith.constant 0 : i32
    return %c0_i32, %c0_i32_0 : i32, i32
  }
  func.func @transform_4(%arg0: i32) -> (i32, i32) {
    %c0_i32 = arith.constant 0 : i32
    %c0_i32_0 = arith.constant 0 : i32
    %c0_i32_1 = arith.constant 0 : i32
    return %c0_i32, %c0_i32_0 : i32, i32
  }
  func.func @transform_5(%arg0: i32) -> (i32, i32) {
    %c0_i32 = arith.constant 0 : i32
    %c0_i32_0 = arith.constant 0 : i32
    return %c0_i32, %arg0 : i32, i32
  }
}

</mosaic_0001>

<llo_original>
// kernel: tpu_custom_call.1
$region0: #{tpu_custom_call.1}
  #allocation0 [shape = 'u32[]', space=smem, size = 0x4, offset = 0x4, fixed_abs, tag = 'smem constant byte address 0x4 - core index']
  #allocation1 [shape = 'u32[144,128]{1,0:T(1,128)}', space=vmem, size = 0x12000, scoped, tag = 'internal scratch']
  #allocation2 [shape = 'f32[1,1]{1,0:T(1,128)S(6)}', space=smem, size = 0x200, scoped, tag = 'scoped memory for tpu_custom_call.1']
  %s0 = inlined_call_operand.vmem [shape: f32[8,21], index: 0, kind: input, shape index: {}]
  %s1 = inlined_call_operand.vmem [shape: f32[32,21], index: 1, kind: input, shape index: {}]
  %s2 = inlined_call_operand.vmem [shape: f32[32,1], index: 2, kind: input, shape index: {}]
  %s3 = inlined_call_operand.vmem [shape: f32[32,1], index: 3, kind: input, shape index: {}]
  %s4 = inlined_call_operand.<no memory space> [shape: f32[1,1], index: 4, kind: input, shape index: {}]
  %s5 = inlined_call_operand.hbm [shape: f32[1,8], index: 5, kind: output, shape index: {}]
  %s6 = sld [smem:[#allocation0]]
  $region30: #{tpu_custom_call.1} parent=0
    _
  %s8 = ssub.s32 1, %s6
  %s9 = scalar_select 0, %s8, %s6
  %10 = sst [smem:[#allocation2]] %s4
  $region1: #{tpu_custom_call.1} parent=0
    #allocation3 [shape = 'u8[512]{0}', space=vmem, size = 0x400, scoped, tag = 'output window, operand 0, single buffered']
    #allocation4 [shape = 's32[1]{0}', space=sflag, size = 0x4, scoped, tag = 'scoped memory for tpu_custom_call.1']
    %11 = vsyncpa [#allocation4], 0
    // Predicated region
    $region2: #{tpu_custom_call.1} parent=1 // pred_check
      _
    $region3: #{tpu_custom_call.1} parent=1 // pred_check_branch
      %13 = sbr.rel (0) target = $region5
    $region4: #{tpu_custom_call.1} parent=1 // pred_region
      _
    $region5: #{tpu_custom_call.1} parent=1 // pred_fallthru
      _
    // Predicated region
    $region6: #{tpu_custom_call.1} parent=1 // pred_check
      _
    $region7: #{tpu_custom_call.1} parent=1 // pred_check_branch
      %15 = sbr.rel (0) target = $region9
    $region8: #{tpu_custom_call.1} parent=1 // pred_region
      _
    $region9: #{tpu_custom_call.1} parent=1 // pred_fallthru
      _
    // Predicated region
    $region10: #{tpu_custom_call.1} parent=1 // pred_check
      _
    $region11: #{tpu_custom_call.1} parent=1 // pred_check_branch
      %17 = sbr.rel (0) target = $region13
    $region12: #{tpu_custom_call.1} parent=1 // pred_region
      _
    $region13: #{tpu_custom_call.1} parent=1 // pred_fallthru
      _
    // Predicated region
    $region14: #{tpu_custom_call.1} parent=1 // pred_check
      _
    $region15: #{tpu_custom_call.1} parent=1 // pred_check_branch
      %19 = sbr.rel (0) target = $region17
    $region16: #{tpu_custom_call.1} parent=1 // pred_region
      _
    $region17: #{tpu_custom_call.1} parent=1 // pred_fallthru
      _
    // Predicated region
    $region18: #{tpu_custom_call.1} parent=1 // pred_check
      _
    $region19: #{tpu_custom_call.1} parent=1 // pred_check_branch
      %21 = sbr.rel (0) target = $region21
    $region20: #{tpu_custom_call.1} parent=1 // pred_region
      _
    $region21: #{tpu_custom_call.1} parent=1 // pred_fallthru
      _
    %v22 = vld [vmem:[%s0] sm:$0xff]
    %v23 = vld [vmem:[%s1] sm:$0xff]
    %v24 = vld [vmem:[%s1 + $0x8] sm:$0xff]
    %v25 = vld [vmem:[%s1 + $0x10] sm:$0xff]
    %v26 = vld [vmem:[%s1 + $0x18] sm:$0xff]
    %v27 = vld [vmem:[%s2] sm:$0xff]
    %v28 = vld [vmem:[%s2 + $0x8] sm:$0xff]
    %v29 = vld [vmem:[%s2 + $0x10] sm:$0xff]
    %v30 = vld [vmem:[%s2 + $0x18] sm:$0xff]
    %32 = vset.pattern.permute.xlu0 0
    %33 = vperm.xlu0 %32, %v27
    %v34 = vpop.permute.xlu0 %33
    %37 = vset.pattern.permute.xlu0 0
    %38 = vperm.xlu0 %37, %v28
    %v39 = vpop.permute.xlu0 %38
    %42 = vset.pattern.permute.xlu0 0
    %43 = vperm.xlu0 %42, %v29
    %v44 = vpop.permute.xlu0 %43
    %47 = vset.pattern.permute.xlu0 0
    %48 = vperm.xlu0 %47, %v30
    %v49 = vpop.permute.xlu0 %48
    %vm51 = vcmask 171008
    %v53 = vsel %vm51, %v23, 0
    %v56 = vsel %vm51, %v24, 0
    %v59 = vsel %vm51, %v25, 0
    %v62 = vsel %vm51, %v26, 0
    %v65 = vsel %vm51, %v22, 0
    %67 = vmatprep.subr.mxu0 0.0
    %68 = vmatpush1.xpose.msra.mxu0 0.0
    %69 = vmatprep.subr.mxu0 0.0
    %70 = vmatpush1.xpose.msra.mxu0 0.0
    %71 = vmatprep.subr.mxu0 0.0
    %72 = vmatpush1.xpose.msra.mxu0 0.0
    %73 = vmatprep.subr.mxu0 0.0
    %74 = vmatpush1.xpose.msra.mxu0 0.0
    %75 = vmatprep.subr.mxu0 0.0
    %76 = vmatpush1.xpose.msra.mxu0 0.0
    %77 = vmatprep.subr.mxu0 0.0
    %78 = vmatpush1.xpose.msra.mxu0 0.0
    %79 = vmatprep.subr.mxu0 0.0
    %80 = vmatpush1.xpose.msra.mxu0 0.0
    %81 = vmatprep.subr.mxu0 0.0
    %82 = vmatpush1.xpose.msra.mxu0 0.0
    %83 = vmatprep.subr.mxu0 0.0
    %84 = vmatpush1.xpose.msra.mxu0 0.0
    %85 = vmatprep.subr.mxu0 0.0
    %86 = vmatpush1.xpose.msra.mxu0 0.0
    %87 = vmatprep.subr.mxu0 0.0
    %88 = vmatpush1.xpose.msra.mxu0 0.0
    %89 = vmatprep.subr.mxu0 0.0
    %90 = vmatpush1.xpose.msra.mxu0 0.0
    %91 = vmatprep.subr.mxu0 0.0
    %92 = vmatpush1.xpose.msra.mxu0 0.0
    %93 = vmatprep.subr.mxu0 0.0
    %94 = vmatpush1.xpose.msra.mxu0 0.0
    %95 = vmatprep.subr.mxu0 0.0
    %96 = vmatpush1.xpose.msra.mxu0 0.0
    %97 = vmatprep.subr.mxu0 0.0
    %98 = vmatpush1.xpose.msra.mxu0 %v65
    %99 = vmatprep.subr.mxu0 0.0
    %100 = vmatpush2.xpose.msra.mxu0 0.0
    %101 = vmatprep.subr.mxu0 0.0
    %102 = vmatpush2.xpose.msra.mxu0 0.0
    %103 = vmatprep.subr.mxu0 0.0
    %104 = vmatpush2.xpose.msra.mxu0 0.0
    %105 = vmatprep.subr.mxu0 0.0
    %106 = vmatpush2.xpose.msra.mxu0 0.0
    %107 = vmatprep.subr.mxu0 0.0
    %108 = vmatpush2.xpose.msra.mxu0 0.0
    %109 = vmatprep.subr.mxu0 0.0
    %110 = vmatpush2.xpose.msra.mxu0 0.0
    %111 = vmatprep.subr.mxu0 0.0
    %112 = vmatpush2.xpose.msra.mxu0 0.0
    %113 = vmatprep.subr.mxu0 0.0
    %114 = vmatpush2.xpose.msra.mxu0 0.0
    %115 = vmatprep.subr.mxu0 0.0
    %116 = vmatpush2.xpose.msra.mxu0 0.0
    %117 = vmatprep.subr.mxu0 0.0
    %118 = vmatpush2.xpose.msra.mxu0 0.0
    %119 = vmatprep.subr.mxu0 0.0
    %120 = vmatpush2.xpose.msra.mxu0 0.0
    %121 = vmatprep.subr.mxu0 0.0
    %122 = vmatpush2.xpose.msra.mxu0 0.0
    %123 = vmatprep.subr.mxu0 0.0
    %124 = vmatpush2.xpose.msra.mxu0 0.0
    %125 = vmatprep.subr.mxu0 0.0
    %126 = vmatpush2.xpose.msra.mxu0 0.0
    %127 = vmatprep.subr.mxu0 0.0
    %128 = vmatpush2.xpose.msra.mxu0 0.0
    %129 = vmatprep.subr.mxu0 0.0
    %130 = vmatpush2.xpose.msra.mxu0 0.0
    %131 = vmatprep.mubr.f32.mxu0 0.0
    %132 = vmatmul.mubr.f32.gmra.mxu0 %v53
    %v133 = vpop.f32.mrf.mxu0
    %v134 = vadd.f32 %v34, %v133
    %v135 = vpop.f32.mrf.mxu0
    %136 = vmatprep.mubr.f32.mxu0 0.0
    %137 = vmatmul.mubr.f32.gmra.mxu0 %v56
    %v138 = vpop.f32.mrf.mxu0
    %v139 = vadd.f32 %v39, %v138
    %v140 = vpop.f32.mrf.mxu0
    %141 = vmatprep.mubr.f32.mxu0 0.0
    %142 = vmatmul.mubr.f32.gmra.mxu0 %v59
    %v143 = vpop.f32.mrf.mxu0
    %v144 = vadd.f32 %v44, %v143
    %v145 = vpop.f32.mrf.mxu0
    %146 = vmatprep.mubr.f32.mxu0 0.0
    %147 = vmatmul.mubr.f32.gmra.mxu0 %v62
    %v148 = vpop.f32.mrf.mxu0
    %v149 = vadd.f32 %v49, %v148
    %v150 = vpop.f32.mrf.mxu0
    %151 = vdwg.mxu0
    %v152 = vmul.f32 %v134, 0.5
    %v153 = vmul.f32 %v139, 0.5
    %v154 = vmul.f32 %v144, 0.5
    %v155 = vmul.f32 %v149, 0.5
    %v156 = vtanh.pop %v152
    %v157 = vtanh.pop %v153
    %v158 = vtanh.pop %v154
    %v159 = vtanh.pop %v155
    %v160 = vmul.f32 %v156, 0.5
    %v161 = vmul.f32 %v157, 0.5
    %v162 = vmul.f32 %v158, 0.5
    %v163 = vmul.f32 %v159, 0.5
    %v164 = vadd.f32 %v160, 0.5
    %v165 = vadd.f32 %v161, 0.5
    %v166 = vadd.f32 %v162, 0.5
    %v167 = vadd.f32 %v163, 0.5
    %v168 = vld [vmem:[%s3] sm:$0xff]
    %v169 = vld [vmem:[%s3 + $0x8] sm:$0xff]
    %v170 = vld [vmem:[%s3 + $0x10] sm:$0xff]
    %v171 = vld [vmem:[%s3 + $0x18] sm:$0xff]
    %173 = vset.pattern.permute.xlu0 0
    %174 = vperm.xlu0 %173, %v168
    %v175 = vpop.permute.xlu0 %174
    %178 = vset.pattern.permute.xlu0 0
    %179 = vperm.xlu0 %178, %v169
    %v180 = vpop.permute.xlu0 %179
    %183 = vset.pattern.permute.xlu0 0
    %184 = vperm.xlu0 %183, %v170
    %v185 = vpop.permute.xlu0 %184
    %188 = vset.pattern.permute.xlu0 0
    %189 = vperm.xlu0 %188, %v171
    %v190 = vpop.permute.xlu0 %189
    %v192 = vmul.f32 %v164, %v175
    %v193 = vmul.f32 %v165, %v180
    %v194 = vmul.f32 %v166, %v185
    %v195 = vmul.f32 %v167, %v190
    %vm196 = vcmask 64512
    %v197 = vsel %vm196, %v192, 0.0
    %v198 = vsel %vm196, %v193, 0.0
    %v199 = vadd.f32 %v197, %v198
    %v200 = vsel %vm196, %v194, 0.0
    %v201 = vadd.f32 %v199, %v200
    %v202 = vsel %vm196, %v195, 0.0
    %v203 = vadd.f32 %v201, %v202
    %v204 = vrot.slane %v203, 4
    %v205 = vadd.f32 %v203, %v204
    %v206 = vrot.slane %v205, 2
    %v207 = vadd.f32 %v205, %v206
    %v208 = vrot.slane %v207, 1
    %v209 = vadd.f32 %v207, %v208
    %s210 = sld [smem:[#allocation2]]
    %v211 = vstv %s210
    %v212 = vadd.f32 %v209, %v211
    %vm213 = vcmask 57344
    %214 = vst.msk [vmem:[#allocation3] sm:$0x1] %vm213, %v212
    // Predicated region
    $region22: #{tpu_custom_call.1} parent=1 // pred_check
      _
    $region23: #{tpu_custom_call.1} parent=1 // pred_check_branch
      %216 = sbr.rel (0) target = $region25
    $region24: #{tpu_custom_call.1} parent=1 // pred_region
      %s218 = ssub.s32 16, 16
      %219 = vsyncadd [#allocation4], %s218
      %s221 = sshll.u32 [#allocation3], 4
      %s222 = int_to_ptr.vmem [resolvable:$true] %s221
      %224 = dma.vmem_to_hbm [thread:$0]  %s222, 16, %s5, [#allocation4]
    $region25: #{tpu_custom_call.1} parent=1 // pred_fallthru
      _
    // Predicated region
    $region26: #{tpu_custom_call.1} parent=1 // pred_check
      _
    $region27: #{tpu_custom_call.1} parent=1 // pred_check_branch
      %226 = sbr.rel (0) target = $region29
    $region28: #{tpu_custom_call.1} parent=1 // pred_region
      %227 = dma.done [#allocation4], 16
    $region29: #{tpu_custom_call.1} parent=1 // pred_fallthru
      _
    %228 = vsyncpa [#allocation4], 1

</llo_original>
